<compile_context>
chip_gen: v6e
topology: v6e:2x2x1
jax: 0.10.0
libtpu: 0.0.40
codegen_flags: <defaults>
</compile_context>

<pallas_src>
import functools

import jax
import jax.numpy as jnp
import numpy as np
from jax.experimental import pallas as pl
from jax.experimental.pallas import tpu as pltpu


def _mdn_head_kernel(h_ref, w_ref, b_ref, y_ref, *, stride, num_g):
    """One row-tile of hidden states -> one lane-dense MDN head slab.

    Output slab layout along the (128-padded) lane dim:
      [0, stride)                 : mus
      [stride, 2*stride)          : sigmas  = exp(.)
      [2*stride, 2*stride+num_g)  : logpi   = log_softmax(.)
      [2*stride+num_g]            : reward logit
      [2*stride+num_g+1]          : not-terminal logit
      remaining lanes             : zero padding (weight/bias zero-padded)
    """
    y = jnp.dot(h_ref[...], w_ref[...],
                preferred_element_type=jnp.float32) + b_ref[...]

    # Single-sublane lane-index masks; jnp.where broadcasts them against the
    # full (row_tile, 128) tile for free (no full-shape iota / compares).
    col = jax.lax.broadcasted_iota(jnp.int32, (1, y.shape[1]), 1)
    sig_mask = (col >= stride) & (col < 2 * stride)
    pi_mask = (col >= 2 * stride) & (col < 2 * stride + num_g)

    # Masked, max-stabilized log-softmax over the real num_g lanes only, so
    # zero-padded columns never enter the reduction.
    pi_vals = jnp.where(pi_mask, y, -jnp.inf)
    m = jnp.max(pi_vals, axis=-1, keepdims=True)
    exp_pi = jnp.where(pi_mask, jnp.exp(y - m), 0.0)
    lse = m + jnp.log(jnp.sum(exp_pi, axis=-1, keepdims=True))

    out = jnp.where(sig_mask, jnp.exp(y), y)     # sigmas
    out = jnp.where(pi_mask, y - lse, out)       # logpi
    y_ref[...] = out


def _round_up(x, m):
    return ((x + m - 1) // m) * m


def _pick_row_tile(rows, row_tile):
    """Row-tile heuristic (mem-bound kernel):
       - rows <= 512        : one grid step (no pipelining overhead)
       - 512 < rows <= 2048 : two ~rows/2 tiles (lets the 'parallel' grid axis
                              shard across both v7x TensorCores; neutral on
                              single-TC v5e/v6e)
       - rows > 2048        : 1024-row tiles (~85% of HBM roofline; ~1.3 MiB
                              double-buffered, well under scoped VMEM on all
                              generations)
    """
    if row_tile is None:
        if rows <= 512:
            row_tile = rows
        elif rows <= 2048:
            row_tile = _round_up((rows + 1) // 2, 8)
        else:
            row_tile = 1024
    if row_tile >= rows:
        return rows                       # full-dim block: any size allowed
    if row_tile % 8:
        row_tile = _round_up(row_tile, 8)  # sub-full blocks must be 8-aligned
        if row_tile >= rows:
            return rows
    return row_tile


def mdn_rnn_head(hidden, weight, bias, *, state_dim, num_gaussians,
                 row_tile=None, use_bf16=False, return_slab=False):
    """hidden: (seq, batch, H) float32
       weight: (H, out_dim), bias: (out_dim,) with
       out_dim = (2*state_dim + 1)*num_gaussians + 2
    Returns mus (S,B,G,D), sigmas (S,B,G,D), logpi (S,B,G), rs (S,B), nts (S,B)
    — or, if return_slab=True, the raw lane-dense (S*B, out_pad) slab.
    """
    seq, batch, H = hidden.shape
    out_dim = (2 * state_dim + 1) * num_gaussians + 2
    assert weight.shape == (H, out_dim)
    stride = num_gaussians * state_dim
    rows = seq * batch

    # Lane-dense output: pad the feature dim to a multiple of 128.
    out_pad = _round_up(out_dim, 128)

    row_tile = _pick_row_tile(rows, row_tile)
    n_steps = pl.cdiv(rows, row_tile)

    in_dtype = jnp.bfloat16 if use_bf16 else jnp.float32
    h2d = hidden.reshape(rows, H).astype(in_dtype)          # no row padding
    w_pad = jnp.pad(weight.astype(jnp.float32),
                    ((0, 0), (0, out_pad - out_dim))).astype(in_dtype)
    b_pad = jnp.pad(bias.astype(jnp.float32),
                    (0, out_pad - out_dim)).reshape(1, out_pad)

    kernel = functools.partial(_mdn_head_kernel,
                               stride=stride, num_g=num_gaussians)

    y = pl.pallas_call(
        kernel,
        out_shape=jax.ShapeDtypeStruct((rows, out_pad), jnp.float32),
        grid_spec=pltpu.PrefetchScalarGridSpec(
            num_scalar_prefetch=0,
            grid=(n_steps,),
            in_specs=[
                pl.BlockSpec((row_tile, H), lambda i: (i, 0)),   # hidden tile
                pl.BlockSpec((H, out_pad), lambda i: (0, 0)),    # full weight
                pl.BlockSpec((1, out_pad), lambda i: (0, 0)),    # bias
            ],
            out_specs=pl.BlockSpec((row_tile, out_pad), lambda i: (i, 0)),
        ),
        compiler_params=pltpu.CompilerParams(
            dimension_semantics=("parallel",)),
    )(h2d, w_pad, b_pad)

    if return_slab:
        return y

    # Slice the lane-dense slab back into the 5 logical outputs (wrapper
    # side).  Consumers that can index the slab directly should pass
    # return_slab=True to avoid this extra HBM pass.
    mus = y[:, :stride].reshape(seq, batch, num_gaussians, state_dim)
    sigmas = y[:, stride:2 * stride].reshape(seq, batch, num_gaussians,
                                             state_dim)
    logpi = y[:, 2 * stride:2 * stride + num_gaussians].reshape(
        seq, batch, num_gaussians)
    rs = y[:, 2 * stride + num_gaussians].reshape(seq, batch)
    nts = y[:, 2 * stride + num_gaussians + 1].reshape(seq, batch)
    return mus, sigmas, logpi, rs, nts


def _reference(hidden, weight, bias, *, state_dim, num_gaussians):
    seq, batch, H = hidden.shape
    y = hidden @ weight + bias          # (S, B, out_dim)
    stride = num_gaussians * state_dim
    mus = y[..., :stride].reshape(seq, batch, num_gaussians, state_dim)
    sigmas = jnp.exp(y[..., stride:2 * stride]).reshape(
        seq, batch, num_gaussians, state_dim)
    pi = y[..., 2 * stride:2 * stride + num_gaussians]
    logpi = jax.nn.log_softmax(pi, axis=-1)
    rs = y[..., -2]
    nts = y[..., -1]
    return mus, sigmas, logpi, rs, nts


if __name__ == "__main__":
    # Module hyperparameters (small, consistent with __init__)
    state_dim = 8
    action_dim = 4          # unused by the base class's compute
    num_hiddens = 32
    num_hidden_layers = 1   # unused by the base class's compute
    num_gaussians = 5
    out_dim = (2 * state_dim + 1) * num_gaussians + 2   # 87

    seq, batch = 8, 4

    key = jax.random.PRNGKey(0)
    k_h, k_w, k_b = jax.random.split(key, 3)

    # Deterministic parameter init mimicking nn.Linear default:
    # U(-1/sqrt(fan_in), 1/sqrt(fan_in)).
    bound = 1.0 / np.sqrt(num_hiddens)
    weight = jax.random.uniform(k_w, (num_hiddens, out_dim),
                                jnp.float32, -bound, bound)
    bias = jax.random.uniform(k_b, (out_dim,), jnp.float32, -bound, bound)

    # Hidden activations stand in for the (subclass) LSTM output.
    hidden = jax.random.normal(k_h, (seq, batch, num_hiddens), jnp.float32)

    refs = _reference(hidden, weight, bias,
                      state_dim=state_dim, num_gaussians=num_gaussians)

    # 1) Default path: single grid step, full-row tile.
    outs = mdn_rnn_head(hidden, weight, bias,
                        state_dim=state_dim, num_gaussians=num_gaussians)
    outs = jax.block_until_ready(outs)
    for got, want in zip(outs, refs):
        np.testing.assert_allclose(np.asarray(got), np.asarray(want),
                                   rtol=1e-5, atol=1e-5)

    # 2) Multi-step + ragged-last-tile path (no wrapper padding): force a
    #    small explicit tile so the boundary-block handling is exercised.
    outs_tiled = mdn_rnn_head(hidden, weight, bias,
                              state_dim=state_dim,
                              num_gaussians=num_gaussians,
                              row_tile=24)          # 32 rows -> tiles 24 + 8
    outs_tiled = jax.block_until_ready(outs_tiled)
    for got, want in zip(outs_tiled, refs):
        np.testing.assert_allclose(np.asarray(got), np.asarray(want),
                                   rtol=1e-5, atol=1e-5)

    print("KERNEL_OK")
</pallas_src>

<mosaic_0001>
module attributes {stable_mosaic.version = 11 : i64} {
  func.func @_mdn_head_kernel(%arg0: i32, %arg1: memref<32x32xf32, #tpu.memory_space<vmem>>, %arg2: memref<32x128xf32, #tpu.memory_space<vmem>>, %arg3: memref<1x128xf32, #tpu.memory_space<vmem>>, %arg4: memref<32x128xf32, #tpu.memory_space<vmem>>) attributes {dimension_semantics = [#tpu.dimension_semantics<parallel>], iteration_bounds = array<i64: 1>, scalar_prefetch = 0 : i64, scratch_operands = 0 : i64, tpu.core_type = #tpu.core_type<tc>, window_params = [{transform_indices = @transform_0, window_bounds = array<i64: 32, 32>}, {pipeline_mode = #tpu.pipeline_mode<synchronous>, transform_indices = @transform_1, window_bounds = array<i64: 32, 128>}, {pipeline_mode = #tpu.pipeline_mode<synchronous>, transform_indices = @transform_2, window_bounds = array<i64: 1, 128>}, {transform_indices = @transform_3, window_bounds = array<i64: 32, 128>}]} {
    %c0 = arith.constant 0 : index
    %c0_0 = arith.constant 0 : index
    %0 = vector.load %arg1[%c0, %c0_0] : memref<32x32xf32, #tpu.memory_space<vmem>>, vector<32x32xf32>
    %c0_1 = arith.constant 0 : index
    %c0_2 = arith.constant 0 : index
    %1 = vector.load %arg2[%c0_1, %c0_2] : memref<32x128xf32, #tpu.memory_space<vmem>>, vector<32x128xf32>
    %cst = arith.constant dense<0.000000e+00> : vector<32x128xf32>
    %2 = tpu.matmul %0, %1, %cst {dimension_numbers = #tpu.dot_dimension_numbers<[1], [0], [0], [1], [0, 0, 1, 1], [], []>} : vector<32x32xf32>, vector<32x128xf32>, vector<32x128xf32> -> vector<32x128xf32>
    %c0_3 = arith.constant 0 : index
    %c0_4 = arith.constant 0 : index
    %3 = vector.load %arg3[%c0_3, %c0_4] : memref<1x128xf32, #tpu.memory_space<vmem>>, vector<1x128xf32>
    %4 = vector.broadcast %3 : vector<1x128xf32> to vector<32x128xf32>
    %5 = arith.addf %2, %4 : vector<32x128xf32>
    %6 = tpu.iota {dimensions = array<i32: 1>} : vector<1x128xi32>
    %c40_i32 = arith.constant 40 : i32
    %7 = vector.broadcast %c40_i32 : i32 to vector<1x128xi32>
    %8 = arith.cmpi sge, %6, %7 : vector<1x128xi32>
    %c80_i32 = arith.constant 80 : i32
    %9 = vector.broadcast %c80_i32 : i32 to vector<1x128xi32>
    %10 = arith.cmpi slt, %6, %9 : vector<1x128xi32>
    %11 = arith.andi %8, %10 : vector<1x128xi1>
    %c80_i32_5 = arith.constant 80 : i32
    %12 = vector.broadcast %c80_i32_5 : i32 to vector<1x128xi32>
    %13 = arith.cmpi sge, %6, %12 : vector<1x128xi32>
    %c85_i32 = arith.constant 85 : i32
    %14 = vector.broadcast %c85_i32 : i32 to vector<1x128xi32>
    %15 = arith.cmpi slt, %6, %14 : vector<1x128xi32>
    %16 = arith.andi %13, %15 : vector<1x128xi1>
    %cst_6 = arith.constant 0xFF800000 : f32
    %17 = vector.shape_cast %16 : vector<1x128xi1> to vector<1x128xi1>
    %18 = vector.broadcast %17 : vector<1x128xi1> to vector<32x128xi1>
    %19 = vector.broadcast %cst_6 : f32 to vector<32x128xf32>
    %20 = arith.select %18, %5, %19 : vector<32x128xi1>, vector<32x128xf32>
    %cst_7 = arith.constant dense<0xFF800000> : vector<32xf32>
    %21 = vector.multi_reduction <maximumf>, %20, %cst_7 [1] : vector<32x128xf32> to vector<32xf32>
    %22 = vector.shape_cast %21 : vector<32xf32> to vector<32x1xf32>
    %23 = vector.broadcast %22 : vector<32x1xf32> to vector<32x128xf32>
    %24 = arith.subf %5, %23 : vector<32x128xf32>
    %25 = math.exp %24 : vector<32x128xf32>
    %cst_8 = arith.constant 0.000000e+00 : f32
    %26 = vector.shape_cast %16 : vector<1x128xi1> to vector<1x128xi1>
    %27 = vector.broadcast %26 : vector<1x128xi1> to vector<32x128xi1>
    %28 = vector.broadcast %cst_8 : f32 to vector<32x128xf32>
    %29 = arith.select %27, %25, %28 : vector<32x128xi1>, vector<32x128xf32>
    %cst_9 = arith.constant dense<0.000000e+00> : vector<32xf32>
    %30 = vector.multi_reduction <add>, %29, %cst_9 [1] : vector<32x128xf32> to vector<32xf32>
    %31 = vector.shape_cast %30 : vector<32xf32> to vector<32x1xf32>
    %32 = math.log %31 : vector<32x1xf32>
    %33 = arith.addf %22, %32 : vector<32x1xf32>
    %34 = math.exp %5 : vector<32x128xf32>
    %35 = vector.shape_cast %11 : vector<1x128xi1> to vector<1x128xi1>
    %36 = vector.broadcast %35 : vector<1x128xi1> to vector<32x128xi1>
    %37 = arith.select %36, %34, %5 : vector<32x128xi1>, vector<32x128xf32>
    %38 = vector.broadcast %33 : vector<32x1xf32> to vector<32x128xf32>
    %39 = arith.subf %5, %38 : vector<32x128xf32>
    %40 = vector.shape_cast %16 : vector<1x128xi1> to vector<1x128xi1>
    %41 = vector.broadcast %40 : vector<1x128xi1> to vector<32x128xi1>
    %42 = arith.select %41, %39, %37 : vector<32x128xi1>, vector<32x128xf32>
    %c0_10 = arith.constant 0 : index
    %c0_11 = arith.constant 0 : index
    %43 = vector.load %arg4[%c0_10, %c0_11] : memref<32x128xf32, #tpu.memory_space<vmem>>, vector<32x128xf32>
    tpu.vector_store %arg4[%c0_10, %c0_11], %42 {strides = array<i32>} : memref<32x128xf32, #tpu.memory_space<vmem>>, vector<32x128xf32>,
    return
  }
  func.func @transform_0(%arg0: i32) -> (i32, i32) {
    %c0_i32 = arith.constant 0 : i32
    %c0_i32_0 = arith.constant 0 : i32
    return %arg0, %c0_i32 : i32, i32
  }
  func.func @transform_1(%arg0: i32) -> (i32, i32) {
    %c0_i32 = arith.constant 0 : i32
    %c0_i32_0 = arith.constant 0 : i32
    %c0_i32_1 = arith.constant 0 : i32
    return %c0_i32, %c0_i32_0 : i32, i32
  }
  func.func @transform_2(%arg0: i32) -> (i32, i32) {
    %c0_i32 = arith.constant 0 : i32
    %c0_i32_0 = arith.constant 0 : i32
    %c0_i32_1 = arith.constant 0 : i32
    return %c0_i32, %c0_i32_0 : i32, i32
  }
  func.func @transform_3(%arg0: i32) -> (i32, i32) {
    %c0_i32 = arith.constant 0 : i32
    %c0_i32_0 = arith.constant 0 : i32
    return %arg0, %c0_i32 : i32, i32
  }
}

</mosaic_0001>

<llo_original>
// kernel: tpu_custom_call.1
$region0: #{tpu_custom_call.1}
  #allocation0 [shape = 'u32[]', space=smem, size = 0x4, offset = 0x4, fixed_abs, tag = 'smem constant byte address 0x4 - core index']
  #allocation1 [shape = 'u32[144,128]{1,0:T(1,128)}', space=vmem, size = 0x12000, scoped, tag = 'internal scratch']
  %s0 = inlined_call_operand.hbm [shape: f32[32,32], index: 0, kind: input, shape index: {}]
  %s1 = inlined_call_operand.hbm [shape: f32[32,128], index: 1, kind: input, shape index: {}]
  %s2 = inlined_call_operand.vmem [shape: f32[1,128], index: 2, kind: input, shape index: {}]
  %s3 = inlined_call_operand.hbm [shape: f32[32,128], index: 3, kind: output, shape index: {}]
  %s4 = sld [smem:[#allocation0]]
  $region30: #{tpu_custom_call.1} parent=0
    _
  %s6 = ssub.s32 1, %s4
  %s7 = scalar_select 0, %s6, %s4
  $region1: #{tpu_custom_call.1} parent=0
    #allocation2 [shape = 'u8[16384]{0}', space=vmem, size = 0x4000, scoped, tag = 'input window, operand 0, single buffered']
    #allocation3 [shape = 's32[1]{0}', space=sflag, size = 0x4, scoped, tag = 'scoped memory for tpu_custom_call.1']
    #allocation4 [shape = 's32[1]{0}', space=sflag, size = 0x4, scoped, tag = 'scoped memory for tpu_custom_call.1']
    #allocation5 [shape = 'u8[16384]{0}', space=vmem, size = 0x4000, scoped, tag = 'input window, operand 1, single buffered']
    #allocation6 [shape = 's32[1]{0}', space=sflag, size = 0x4, scoped, tag = 'scoped memory for tpu_custom_call.1']
    #allocation7 [shape = 'u8[16384]{0}', space=vmem, size = 0x4000, scoped, tag = 'output window, operand 0, single buffered']
    %8 = vsyncpa [#allocation3], 0
    %9 = vsyncpa [#allocation6], 0
    %10 = vsyncpa [#allocation4], 0
    // Predicated region
    $region2: #{tpu_custom_call.1} parent=1 // pred_check
      _
    $region3: #{tpu_custom_call.1} parent=1 // pred_check_branch
      %12 = sbr.rel (0) target = $region5
    $region4: #{tpu_custom_call.1} parent=1 // pred_region
      %s14 = ssub.s32 512, 512
      %15 = vsyncadd [#allocation3], %s14
      %s16 = sshll.u32 [#allocation2], 4
      %s17 = int_to_ptr.vmem [resolvable:$true] %s16
      %22 = dma.hbm_to_vmem [thread:$0]  %s0, 512, %s17, [#allocation3], 128, 128, 8
    $region5: #{tpu_custom_call.1} parent=1 // pred_fallthru
      _
    // Predicated region
    $region6: #{tpu_custom_call.1} parent=1 // pred_check
      _
    $region7: #{tpu_custom_call.1} parent=1 // pred_check_branch
      %24 = sbr.rel (0) target = $region9
    $region8: #{tpu_custom_call.1} parent=1 // pred_region
      %s26 = ssub.s32 512, 512
      %27 = vsyncadd [#allocation6], %s26
      %s28 = sshll.u32 [#allocation5], 4
      %s29 = int_to_ptr.vmem [resolvable:$true] %s28
      %34 = dma.hbm_to_vmem [thread:$0]  %s1, 512, %s29, [#allocation6], 128, 128, 8
    $region9: #{tpu_custom_call.1} parent=1 // pred_fallthru
      _
    // Predicated region
    $region10: #{tpu_custom_call.1} parent=1 // pred_check
      _
    $region11: #{tpu_custom_call.1} parent=1 // pred_check_branch
      %36 = sbr.rel (0) target = $region13
    $region12: #{tpu_custom_call.1} parent=1 // pred_region
      _
    $region13: #{tpu_custom_call.1} parent=1 // pred_fallthru
      _
    // Predicated region
    $region14: #{tpu_custom_call.1} parent=1 // pred_check
      _
    $region15: #{tpu_custom_call.1} parent=1 // pred_check_branch
      %38 = sbr.rel (0) target = $region17
    $region16: #{tpu_custom_call.1} parent=1 // pred_region
      %39 = dma.done [#allocation3], 512
    $region17: #{tpu_custom_call.1} parent=1 // pred_fallthru
      _
    // Predicated region
    $region18: #{tpu_custom_call.1} parent=1 // pred_check
      _
    $region19: #{tpu_custom_call.1} parent=1 // pred_check_branch
      %41 = sbr.rel (0) target = $region21
    $region20: #{tpu_custom_call.1} parent=1 // pred_region
      %42 = dma.done [#allocation6], 512
    $region21: #{tpu_custom_call.1} parent=1 // pred_fallthru
      _
    %v43 = vld [vmem:[#allocation2] sm:$0xff]
    %v44 = vld [vmem:[#allocation2 + $0x8] sm:$0xff]
    %v45 = vld [vmem:[#allocation2 + $0x10] sm:$0xff]
    %v46 = vld [vmem:[#allocation2 + $0x18] sm:$0xff]
    %v47 = vld [vmem:[#allocation5] sm:$0xff]
    %v48 = vld [vmem:[#allocation5 + $0x8] sm:$0xff]
    %v49 = vld [vmem:[#allocation5 + $0x10] sm:$0xff]
    %v50 = vld [vmem:[#allocation5 + $0x18] sm:$0xff]
    %v51 = vld [vmem:[%s2] sm:$0x1]
    %v53 = vlaneseq
    %v54 = vshrl.u32 %v53, 7
    %v55 = vsub.s32 0, %v54
    %v56 = vrot.slane %v51, %v55
    %vm58 = vcmask 261120
    %v60 = vsel %vm58, %v43, 0
    %v63 = vsel %vm58, %v44, 0
    %v66 = vsel %vm58, %v45, 0
    %v69 = vsel %vm58, %v46, 0
    %71 = vmatprep.subr.mxu0 0.0
    %72 = vmatpush1.msra.mxu0 0.0
    %73 = vmatprep.subr.mxu0 0.0
    %74 = vmatpush1.msra.mxu0 0.0
    %75 = vmatprep.subr.mxu0 0.0
    %76 = vmatpush1.msra.mxu0 0.0
    %77 = vmatprep.subr.mxu0 0.0
    %78 = vmatpush1.msra.mxu0 0.0
    %79 = vmatprep.subr.mxu0 0.0
    %80 = vmatpush1.msra.mxu0 0.0
    %81 = vmatprep.subr.mxu0 0.0
    %82 = vmatpush1.msra.mxu0 0.0
    %83 = vmatprep.subr.mxu0 0.0
    %84 = vmatpush1.msra.mxu0 0.0
    %85 = vmatprep.subr.mxu0 0.0
    %86 = vmatpush1.msra.mxu0 0.0
    %87 = vmatprep.subr.mxu0 0.0
    %88 = vmatpush1.msra.mxu0 0.0
    %89 = vmatprep.subr.mxu0 0.0
    %90 = vmatpush1.msra.mxu0 0.0
    %91 = vmatprep.subr.mxu0 0.0
    %92 = vmatpush1.msra.mxu0 0.0
    %93 = vmatprep.subr.mxu0 0.0
    %94 = vmatpush1.msra.mxu0 0.0
    %95 = vmatprep.subr.mxu0 0.0
    %96 = vmatpush1.msra.mxu0 %v50
    %97 = vmatprep.subr.mxu0 0.0
    %98 = vmatpush1.msra.mxu0 %v49
    %99 = vmatprep.subr.mxu0 0.0
    %100 = vmatpush1.msra.mxu0 %v48
    %101 = vmatprep.subr.mxu0 0.0
    %102 = vmatpush1.msra.mxu0 %v47
    %103 = vmatprep.subr.mxu0 0.0
    %104 = vmatpush2.msra.mxu0 0.0
    %105 = vmatprep.subr.mxu0 0.0
    %106 = vmatpush2.msra.mxu0 0.0
    %107 = vmatprep.subr.mxu0 0.0
    %108 = vmatpush2.msra.mxu0 0.0
    %109 = vmatprep.subr.mxu0 0.0
    %110 = vmatpush2.msra.mxu0 0.0
    %111 = vmatprep.subr.mxu0 0.0
    %112 = vmatpush2.msra.mxu0 0.0
    %113 = vmatprep.subr.mxu0 0.0
    %114 = vmatpush2.msra.mxu0 0.0
    %115 = vmatprep.subr.mxu0 0.0
    %116 = vmatpush2.msra.mxu0 0.0
    %117 = vmatprep.subr.mxu0 0.0
    %118 = vmatpush2.msra.mxu0 0.0
    %119 = vmatprep.subr.mxu0 0.0
    %120 = vmatpush2.msra.mxu0 0.0
    %121 = vmatprep.subr.mxu0 0.0
    %122 = vmatpush2.msra.mxu0 0.0
    %123 = vmatprep.subr.mxu0 0.0
    %124 = vmatpush2.msra.mxu0 0.0
    %125 = vmatprep.subr.mxu0 0.0
    %126 = vmatpush2.msra.mxu0 0.0
    %127 = vmatprep.subr.mxu0 0.0
    %128 = vmatpush2.msra.mxu0 0.0
    %129 = vmatprep.subr.mxu0 0.0
    %130 = vmatpush2.msra.mxu0 0.0
    %131 = vmatprep.subr.mxu0 0.0
    %132 = vmatpush2.msra.mxu0 0.0
    %133 = vmatprep.subr.mxu0 0.0
    %134 = vmatpush2.msra.mxu0 0.0
    %135 = vmatprep.mubr.f32.mxu0 0.0
    %136 = vmatmul.mubr.f32.gmra.mxu0 %v60
    %v137 = vpop.f32.mrf.mxu0
    %v138 = vadd.f32 %v56, %v137
    %v139 = vpop.f32.mrf.mxu0
    %140 = vmatprep.mubr.f32.mxu0 0.0
    %141 = vmatmul.mubr.f32.gmra.mxu0 %v63
    %v142 = vpop.f32.mrf.mxu0
    %v143 = vadd.f32 %v56, %v142
    %v144 = vpop.f32.mrf.mxu0
    %145 = vmatprep.mubr.f32.mxu0 0.0
    %146 = vmatmul.mubr.f32.gmra.mxu0 %v66
    %v147 = vpop.f32.mrf.mxu0
    %v148 = vadd.f32 %v56, %v147
    %v149 = vpop.f32.mrf.mxu0
    %150 = vmatprep.mubr.f32.mxu0 0.0
    %151 = vmatmul.mubr.f32.gmra.mxu0 %v69
    %v152 = vpop.f32.mrf.mxu0
    %v153 = vadd.f32 %v56, %v152
    %v154 = vpop.f32.mrf.mxu0
    %155 = vdwg.mxu0
    %v156 = vlaneseq
    %v157 = vand.u32 %v156, 127
    %vm158 = vcmp.ge.s32.totalorder %v157, 40
    %vm159 = vcmp.lt.s32.totalorder %v157, 80
    %vm160 = vmand %vm158, %vm159
    %vm161 = vcmp.ge.s32.totalorder %v157, 80
    %vm162 = vcmp.lt.s32.totalorder %v157, 85
    %vm163 = vmand %vm161, %vm162
    %v164 = vsel %vm163, 1, 0
    %vm165 = vcmp.eq.s32.totalorder %v164, 1
    %v166 = vsel %vm165, %v138, -inf
    %v167 = vsel %vm165, %v143, -inf
    %v168 = vsel %vm165, %v148, -inf
    %v169 = vsel %vm165, %v153, -inf
    %170 = vmax.xlane.f32.xlu0 %v166
    %v171 = vpop.xlane.xlu0 %170
    %172 = vmax.xlane.f32.xlu0 %v167
    %v173 = vpop.xlane.xlu0 %172
    %174 = vmax.xlane.f32.xlu0 %v168
    %v175 = vpop.xlane.xlu0 %174
    %176 = vmax.xlane.f32.xlu0 %v169
    %v177 = vpop.xlane.xlu0 %176
    %v178 = vsub.f32 %v138, %v171
    %v179 = vsub.f32 %v143, %v173
    %v180 = vsub.f32 %v148, %v175
    %v181 = vsub.f32 %v153, %v177
    %v182 = vmul.f32 %v178, 1.442695
    %v183 = vpow.pop %v182
    %v184 = vmul.f32 %v179, 1.442695
    %v185 = vpow.pop %v184
    %v186 = vmul.f32 %v180, 1.442695
    %v187 = vpow.pop %v186
    %v188 = vmul.f32 %v181, 1.442695
    %v189 = vpow.pop %v188
    %v190 = vsel %vm165, %v183, 0.0
    %v191 = vsel %vm165, %v185, 0.0
    %v192 = vsel %vm165, %v187, 0.0
    %v193 = vsel %vm165, %v189, 0.0
    %194 = vadd.xlane.f32.xlu0 %v190
    %v195 = vpop.xlane.xlu0 %194
    %196 = vadd.xlane.f32.xlu0 %v191
    %v197 = vpop.xlane.xlu0 %196
    %198 = vadd.xlane.f32.xlu0 %v192
    %v199 = vpop.xlane.xlu0 %198
    %200 = vadd.xlane.f32.xlu0 %v193
    %v201 = vpop.xlane.xlu0 %200
    %v202 = vlog2.pop %v195
    %v203 = vmul.f32 %v202, 0.6931472
    %v204 = vlog2.pop %v197
    %v205 = vmul.f32 %v204, 0.6931472
    %v206 = vlog2.pop %v199
    %v207 = vmul.f32 %v206, 0.6931472
    %v208 = vlog2.pop %v201
    %v209 = vmul.f32 %v208, 0.6931472
    %v210 = vadd.f32 %v171, %v203
    %v211 = vadd.f32 %v173, %v205
    %v212 = vadd.f32 %v175, %v207
    %v213 = vadd.f32 %v177, %v209
    %v214 = vmul.f32 %v138, 1.442695
    %v215 = vpow.pop %v214
    %v216 = vmul.f32 %v143, 1.442695
    %v217 = vpow.pop %v216
    %v218 = vmul.f32 %v148, 1.442695
    %v219 = vpow.pop %v218
    %v220 = vmul.f32 %v153, 1.442695
    %v221 = vpow.pop %v220
    %v222 = vsel %vm160, 1, 0
    %vm223 = vcmp.eq.s32.totalorder %v222, 1
    %v224 = vsel %vm223, %v215, %v138
    %v225 = vsel %vm223, %v217, %v143
    %v226 = vsel %vm223, %v219, %v148
    %v227 = vsel %vm223, %v221, %v153
    %v228 = vsub.f32 %v138, %v210
    %v229 = vsub.f32 %v143, %v211
    %v230 = vsub.f32 %v148, %v212
    %v231 = vsub.f32 %v153, %v213
    %v232 = vsel %vm165, %v228, %v224
    %v233 = vsel %vm165, %v229, %v225
    %v234 = vsel %vm165, %v230, %v226
    %v235 = vsel %vm165, %v231, %v227
    %236 = vst [vmem:[#allocation7] sm:$0xff] %v232
    %237 = vst [vmem:[#allocation7 + $0x8] sm:$0xff] %v233
    %238 = vst [vmem:[#allocation7 + $0x10] sm:$0xff] %v234
    %239 = vst [vmem:[#allocation7 + $0x18] sm:$0xff] %v235
    // Predicated region
    $region22: #{tpu_custom_call.1} parent=1 // pred_check
      _
    $region23: #{tpu_custom_call.1} parent=1 // pred_check_branch
      %241 = sbr.rel (0) target = $region25
    $region24: #{tpu_custom_call.1} parent=1 // pred_region
      %s243 = ssub.s32 512, 512
      %244 = vsyncadd [#allocation4], %s243
      %s245 = sshll.u32 [#allocation7], 4
      %s246 = int_to_ptr.vmem [resolvable:$true] %s245
      %251 = dma.vmem_to_hbm [thread:$0]  %s246, 512, %s3, [#allocation4], 128, 128, 8
    $region25: #{tpu_custom_call.1} parent=1 // pred_fallthru
      _
    // Predicated region
    $region26: #{tpu_custom_call.1} parent=1 // pred_check
      _
    $region27: #{tpu_custom_call.1} parent=1 // pred_check_branch
      %253 = sbr.rel (0) target = $region29
    $region28: #{tpu_custom_call.1} parent=1 // pred_region
      %254 = dma.done [#allocation4], 512
    $region29: #{tpu_custom_call.1} parent=1 // pred_fallthru
      _
    %255 = vsyncpa [#allocation3], 1
    %256 = vsyncpa [#allocation6], 1
    %257 = vsyncpa [#allocation4], 1

</llo_original>
